<compile_context>
chip_gen: v5e
topology: v5e:2x2
jax: 0.10.0
libtpu: 0.0.40
codegen_flags: <defaults>
</compile_context>

<pallas_src>
import jax
import jax.numpy as jnp
from jax.experimental import pallas as pl
from jax.experimental.pallas import tpu as pltpu

COPIES = 12  # rows of x packed per lane group: 12 * 10 features = 120 lanes


def mynet_kernel(x_ref, w1_ref, b1_ref, w2_ref, b2_ref, o_ref):
    # Hidden layer: h = relu(x @ W1_blk + b1_blk)   (MXU matmul + VPU elementwise)
    h = jnp.dot(x_ref[...], w1_ref[...], preferred_element_type=jnp.float32)
    h = jnp.maximum(h + b1_ref[...], 0.0)
    # Output layer: y = h @ W2_blk + b2_blk
    y = jnp.dot(h, w2_ref[...], preferred_element_type=jnp.float32)
    o_ref[...] = (y + b2_ref[...]).astype(o_ref.dtype)


def _round_up(n, m):
    return ((n + m - 1) // m) * m


def pack_params(w1_t, b1, w2_t, b2, copies=COPIES):
    """Expand the (in, out) 10x10 weights into block-diagonal (120, 120) matrices
    (copies on the diagonal) and tile the (1, 10) biases to (1, 120). Done once."""
    eye = jnp.eye(copies, dtype=w1_t.dtype)
    w1_blk = jnp.kron(eye, w1_t)          # block-diagonal: diag blocks == w1_t
    w2_blk = jnp.kron(eye, w2_t)
    b1_blk = jnp.tile(b1, (1, copies))
    b2_blk = jnp.tile(b2, (1, copies))
    return w1_blk, b1_blk, w2_blk, b2_blk


def mynet_forward(x, w1_blk, b1_blk, w2_blk, b2_blk, *, copies=COPIES, tg_max=2048):
    """x: (B, 10) float32. Packed block-diagonal params from pack_params().
    Returns (B, 10) float32 = lin2(relu(lin1(x)))."""
    B, F = x.shape
    W = w1_blk.shape[1]                    # 120 packed lanes
    assert W == copies * F

    # The lane packing needs B to be a multiple of `copies`; pad (rarely) if not.
    B_pad = _round_up(B, copies)
    if B_pad != B:
        x = jnp.pad(x, ((0, B_pad - B), (0, 0)))
    G = B_pad // copies
    xp = x.reshape(G, W)                   # free, contiguous reshape of row-major x

    # Packed-row tile: multiple of 8 sublanes, capped at tg_max, and (when there is
    # more than one tile of work) at least 2 grid steps so v7x's 2 TCs both get work.
    if G <= 8:
        tg = G                             # single block == full array dim (legal)
    else:
        tg = max(8, min(tg_max, _round_up(pl.cdiv(G, 2), 8)))
    grid = (pl.cdiv(G, tg),)               # ragged last block: OOB writes are masked

    out = pl.pallas_call(
        mynet_kernel,
        out_shape=jax.ShapeDtypeStruct((G, W), jnp.float32),
        grid_spec=pltpu.PrefetchScalarGridSpec(
            num_scalar_prefetch=0,
            grid=grid,
            in_specs=[
                # Packed activations: tiled over packed rows (double-buffered DMA).
                pl.BlockSpec((tg, W), lambda i: (i, 0)),
                # Block-diagonal weights / biases: same block every step -> VMEM-resident.
                pl.BlockSpec((W, W), lambda i: (0, 0)),
                pl.BlockSpec((1, W), lambda i: (0, 0)),
                pl.BlockSpec((W, W), lambda i: (0, 0)),
                pl.BlockSpec((1, W), lambda i: (0, 0)),
            ],
            out_specs=pl.BlockSpec((tg, W), lambda i: (i, 0)),
        ),
        compiler_params=pltpu.CompilerParams(
            # Packed-row tiles are independent -> shard across TCs on v7x.
            dimension_semantics=("parallel",),
            # Explicit so v5e's 16 MiB scoped default never binds; footprint at
            # tg=2048 is < 8 MiB, so this fits every generation including v7x.
            vmem_limit_bytes=32 * 1024 * 1024,
        ),
    )(xp, w1_blk, b1_blk, w2_blk, b2_blk)

    out = out.reshape(B_pad, F)            # free reshape back to (B_pad, 10)
    return out[:B] if B_pad != B else out


def init_params(key):
    """Deterministic init mirroring nn.Linear(10, 10) shapes.
    PyTorch stores W as (out, in); we keep the transposed (in, out) form."""
    k1, k2, k3, k4 = jax.random.split(key, 4)
    fan_in = 10
    bound = 1.0 / jnp.sqrt(fan_in)
    w1_t = jax.random.uniform(k1, (10, 10), jnp.float32, -bound, bound)
    b1 = jax.random.uniform(k2, (1, 10), jnp.float32, -bound, bound)
    w2_t = jax.random.uniform(k3, (10, 10), jnp.float32, -bound, bound)
    b2 = jax.random.uniform(k4, (1, 10), jnp.float32, -bound, bound)
    return w1_t, b1, w2_t, b2


def _reference(x, w1_t, b1, w2_t, b2):
    return jnp.maximum(x @ w1_t + b1, 0.0) @ w2_t + b2


if __name__ == "__main__":
    key = jax.random.PRNGKey(0)
    kx, kx2, kp = jax.random.split(key, 3)
    w1_t, b1, w2_t, b2 = init_params(kp)
    w1_blk, b1_blk, w2_blk, b2_blk = pack_params(w1_t, b1, w2_t, b2)

    # Small batch, not a multiple of 12 -> exercises the pad-to-12 path, single block.
    B = 8
    x = jax.random.normal(kx, (B, 10), jnp.float32)
    out = jax.block_until_ready(mynet_forward(x, w1_blk, b1_blk, w2_blk, b2_blk))
    ref = _reference(x, w1_t, b1, w2_t, b2)
    assert out.shape == (B, 10)
    assert jnp.allclose(out, ref, atol=1e-4, rtol=1e-4)

    # Larger batch, multiple of 12 (no wrapper pad) but packed rows (G=25) not a
    # multiple of the tile -> exercises multi-step grid + ragged (masked) last block.
    B2 = 300
    x2 = jax.random.normal(kx2, (B2, 10), jnp.float32)
    out2 = jax.block_until_ready(mynet_forward(x2, w1_blk, b1_blk, w2_blk, b2_blk))
    ref2 = _reference(x2, w1_t, b1, w2_t, b2)
    assert out2.shape == (B2, 10)
    assert jnp.allclose(out2, ref2, atol=1e-4, rtol=1e-4)

    print("KERNEL_OK")
</pallas_src>

<mosaic_0001>
module attributes {stable_mosaic.version = 11 : i64} {
  func.func @mynet_kernel(%arg0: i32, %arg1: memref<1x120xf32, #tpu.memory_space<vmem>>, %arg2: memref<120x120xf32, #tpu.memory_space<vmem>>, %arg3: memref<1x120xf32, #tpu.memory_space<vmem>>, %arg4: memref<120x120xf32, #tpu.memory_space<vmem>>, %arg5: memref<1x120xf32, #tpu.memory_space<vmem>>, %arg6: memref<1x120xf32, #tpu.memory_space<vmem>>) attributes {dimension_semantics = [#tpu.dimension_semantics<parallel>], iteration_bounds = array<i64: 1>, scalar_prefetch = 0 : i64, scratch_operands = 0 : i64, tpu.core_type = #tpu.core_type<tc>, window_params = [{transform_indices = @transform_0, window_bounds = array<i64: 1, 120>}, {pipeline_mode = #tpu.pipeline_mode<synchronous>, transform_indices = @transform_1, window_bounds = array<i64: 120, 120>}, {pipeline_mode = #tpu.pipeline_mode<synchronous>, transform_indices = @transform_2, window_bounds = array<i64: 1, 120>}, {pipeline_mode = #tpu.pipeline_mode<synchronous>, transform_indices = @transform_3, window_bounds = array<i64: 120, 120>}, {pipeline_mode = #tpu.pipeline_mode<synchronous>, transform_indices = @transform_4, window_bounds = array<i64: 1, 120>}, {transform_indices = @transform_5, window_bounds = array<i64: 1, 120>}]} {
    %c0 = arith.constant 0 : index
    %c0_0 = arith.constant 0 : index
    %0 = vector.load %arg1[%c0, %c0_0] : memref<1x120xf32, #tpu.memory_space<vmem>>, vector<1x120xf32>
    %c0_1 = arith.constant 0 : index
    %c0_2 = arith.constant 0 : index
    %1 = vector.load %arg2[%c0_1, %c0_2] : memref<120x120xf32, #tpu.memory_space<vmem>>, vector<120x120xf32>
    %cst = arith.constant dense<0.000000e+00> : vector<1x120xf32>
    %2 = tpu.matmul %0, %1, %cst {dimension_numbers = #tpu.dot_dimension_numbers<[1], [0], [0], [1], [0, 0, 1, 1], [], []>} : vector<1x120xf32>, vector<120x120xf32>, vector<1x120xf32> -> vector<1x120xf32>
    %c0_3 = arith.constant 0 : index
    %c0_4 = arith.constant 0 : index
    %3 = vector.load %arg3[%c0_3, %c0_4] : memref<1x120xf32, #tpu.memory_space<vmem>>, vector<1x120xf32>
    %4 = arith.addf %2, %3 : vector<1x120xf32>
    %cst_5 = arith.constant 0.000000e+00 : f32
    %5 = vector.broadcast %cst_5 : f32 to vector<1x120xf32>
    %6 = arith.maximumf %4, %5 : vector<1x120xf32>
    %c0_6 = arith.constant 0 : index
    %c0_7 = arith.constant 0 : index
    %7 = vector.load %arg4[%c0_6, %c0_7] : memref<120x120xf32, #tpu.memory_space<vmem>>, vector<120x120xf32>
    %cst_8 = arith.constant dense<0.000000e+00> : vector<1x120xf32>
    %8 = tpu.matmul %6, %7, %cst_8 {dimension_numbers = #tpu.dot_dimension_numbers<[1], [0], [0], [1], [0, 0, 1, 1], [], []>} : vector<1x120xf32>, vector<120x120xf32>, vector<1x120xf32> -> vector<1x120xf32>
    %c0_9 = arith.constant 0 : index
    %c0_10 = arith.constant 0 : index
    %9 = vector.load %arg5[%c0_9, %c0_10] : memref<1x120xf32, #tpu.memory_space<vmem>>, vector<1x120xf32>
    %10 = arith.addf %8, %9 : vector<1x120xf32>
    %c0_11 = arith.constant 0 : index
    %c0_12 = arith.constant 0 : index
    %11 = vector.load %arg6[%c0_11, %c0_12] : memref<1x120xf32, #tpu.memory_space<vmem>>, vector<1x120xf32>
    tpu.vector_store %arg6[%c0_11, %c0_12], %10 {strides = array<i32>} : memref<1x120xf32, #tpu.memory_space<vmem>>, vector<1x120xf32>,
    return
  }
  func.func @transform_0(%arg0: i32) -> (i32, i32) {
    %c0_i32 = arith.constant 0 : i32
    %c0_i32_0 = arith.constant 0 : i32
    return %arg0, %c0_i32 : i32, i32
  }
  func.func @transform_1(%arg0: i32) -> (i32, i32) {
    %c0_i32 = arith.constant 0 : i32
    %c0_i32_0 = arith.constant 0 : i32
    %c0_i32_1 = arith.constant 0 : i32
    return %c0_i32, %c0_i32_0 : i32, i32
  }
  func.func @transform_2(%arg0: i32) -> (i32, i32) {
    %c0_i32 = arith.constant 0 : i32
    %c0_i32_0 = arith.constant 0 : i32
    %c0_i32_1 = arith.constant 0 : i32
    return %c0_i32, %c0_i32_0 : i32, i32
  }
  func.func @transform_3(%arg0: i32) -> (i32, i32) {
    %c0_i32 = arith.constant 0 : i32
    %c0_i32_0 = arith.constant 0 : i32
    %c0_i32_1 = arith.constant 0 : i32
    return %c0_i32, %c0_i32_0 : i32, i32
  }
  func.func @transform_4(%arg0: i32) -> (i32, i32) {
    %c0_i32 = arith.constant 0 : i32
    %c0_i32_0 = arith.constant 0 : i32
    %c0_i32_1 = arith.constant 0 : i32
    return %c0_i32, %c0_i32_0 : i32, i32
  }
  func.func @transform_5(%arg0: i32) -> (i32, i32) {
    %c0_i32 = arith.constant 0 : i32
    %c0_i32_0 = arith.constant 0 : i32
    return %arg0, %c0_i32 : i32, i32
  }
}

</mosaic_0001>

<llo_original>
// kernel: tpu_custom_call.1
$region0: #{tpu_custom_call.1}
  #allocation0 [shape = 'u32[]', space=smem, size = 0x4, offset = 0x4, fixed_abs, tag = 'smem constant byte address 0x4 - core index']
  #allocation1 [shape = 'u32[72,128]{1,0:T(1,128)}', space=vmem, size = 0x9000, scoped, tag = 'internal scratch']
  %s0 = inlined_call_operand.hbm [shape: f32[1,120], index: 0, kind: input, shape index: {}]
  %s1 = inlined_call_operand.hbm [shape: f32[120,120], index: 1, kind: input, shape index: {}]
  %s2 = inlined_call_operand.vmem [shape: f32[1,120], index: 2, kind: input, shape index: {}]
  %s3 = inlined_call_operand.hbm [shape: f32[120,120], index: 3, kind: input, shape index: {}]
  %s4 = inlined_call_operand.vmem [shape: f32[1,120], index: 4, kind: input, shape index: {}]
  %s5 = inlined_call_operand.hbm [shape: f32[1,120], index: 5, kind: output, shape index: {}]
  %s6 = sld [smem:[#allocation0]]
  $region42: #{tpu_custom_call.1} parent=0
    _
  %s8 = ssub.s32 1, %s6
  %s9 = scalar_select 0, %s8, %s6
  $region1: #{tpu_custom_call.1} parent=0
    #allocation2 [shape = 'u8[512]{0}', space=vmem, size = 0x400, scoped, tag = 'input window, operand 0, single buffered']
    #allocation3 [shape = 's32[1]{0}', space=sflag, size = 0x4, scoped, tag = 'scoped memory for tpu_custom_call.1']
    #allocation4 [shape = 's32[1]{0}', space=sflag, size = 0x4, scoped, tag = 'scoped memory for tpu_custom_call.1']
    #allocation5 [shape = 'u8[61440]{0}', space=vmem, size = 0xf000, scoped, tag = 'input window, operand 1, single buffered']
    #allocation6 [shape = 's32[1]{0}', space=sflag, size = 0x4, scoped, tag = 'scoped memory for tpu_custom_call.1']
    #allocation7 [shape = 'u8[61440]{0}', space=vmem, size = 0xf000, scoped, tag = 'input window, operand 3, single buffered']
    #allocation8 [shape = 'u8[512]{0}', space=vmem, size = 0x400, scoped, tag = 'output window, operand 0, single buffered']
    %10 = vsyncpa [#allocation3], 0
    %11 = vsyncpa [#allocation6], 0
    %12 = vsyncpa [#allocation4], 0
    // Predicated region
    $region2: #{tpu_custom_call.1} parent=1 // pred_check
      _
    $region3: #{tpu_custom_call.1} parent=1 // pred_check_branch
      %14 = sbr.rel (0) target = $region5
    $region4: #{tpu_custom_call.1} parent=1 // pred_region
      %16 = vsyncadd [#allocation3], 0
      %s18 = sshll.u32 %s0, 4
      %s19 = int_to_ptr.hbm [resolvable:$true] %s18
      %s20 = sshll.u32 [#allocation2], 4
      %s21 = int_to_ptr.vmem [resolvable:$true] %s20
      %23 = dma.hbm_to_vmem [thread:$0]  %s19, 16, %s21, [#allocation3]
    $region5: #{tpu_custom_call.1} parent=1 // pred_fallthru
      _
    // Predicated region
    $region6: #{tpu_custom_call.1} parent=1 // pred_check
      _
    $region7: #{tpu_custom_call.1} parent=1 // pred_check_branch
      %25 = sbr.rel (0) target = $region9
    $region8: #{tpu_custom_call.1} parent=1 // pred_region
      %27 = vsyncadd [#allocation6], 0
      %s28 = sshll.u32 %s1, 4
      %s29 = int_to_ptr.hbm [resolvable:$true] %s28
      %s30 = sshll.u32 [#allocation5], 4
      %s31 = int_to_ptr.vmem [resolvable:$true] %s30
      %36 = dma.hbm_to_vmem [thread:$0]  %s29, 1920, %s31, [#allocation6], 128, 128, 8
    $region9: #{tpu_custom_call.1} parent=1 // pred_fallthru
      _
    // Predicated region
    $region10: #{tpu_custom_call.1} parent=1 // pred_check
      _
    $region11: #{tpu_custom_call.1} parent=1 // pred_check_branch
      %38 = sbr.rel (0) target = $region13
    $region12: #{tpu_custom_call.1} parent=1 // pred_region
      _
    $region13: #{tpu_custom_call.1} parent=1 // pred_fallthru
      _
    // Predicated region
    $region14: #{tpu_custom_call.1} parent=1 // pred_check
      _
    $region15: #{tpu_custom_call.1} parent=1 // pred_check_branch
      %40 = sbr.rel (0) target = $region17
    $region16: #{tpu_custom_call.1} parent=1 // pred_region
      %42 = vsyncadd [#allocation6], 0
      %s43 = sshll.u32 %s3, 4
      %s44 = int_to_ptr.hbm [resolvable:$true] %s43
      %s45 = sshll.u32 [#allocation7], 4
      %s46 = int_to_ptr.vmem [resolvable:$true] %s45
      %51 = dma.hbm_to_vmem [thread:$0]  %s44, 1920, %s46, [#allocation6], 128, 128, 8
    $region17: #{tpu_custom_call.1} parent=1 // pred_fallthru
      _
    // Predicated region
    $region18: #{tpu_custom_call.1} parent=1 // pred_check
      _
    $region19: #{tpu_custom_call.1} parent=1 // pred_check_branch
      %53 = sbr.rel (0) target = $region21
    $region20: #{tpu_custom_call.1} parent=1 // pred_region
      _
    $region21: #{tpu_custom_call.1} parent=1 // pred_fallthru
      _
    // Predicated region
    $region22: #{tpu_custom_call.1} parent=1 // pred_check
      _
    $region23: #{tpu_custom_call.1} parent=1 // pred_check_branch
      %55 = sbr.rel (0) target = $region25
    $region24: #{tpu_custom_call.1} parent=1 // pred_region
      %57 = dma.done [#allocation3], 16
    $region25: #{tpu_custom_call.1} parent=1 // pred_fallthru
      _
    // Predicated region
    $region26: #{tpu_custom_call.1} parent=1 // pred_check
      _
    $region27: #{tpu_custom_call.1} parent=1 // pred_check_branch
      %59 = sbr.rel (0) target = $region29
    $region28: #{tpu_custom_call.1} parent=1 // pred_region
      %61 = dma.done [#allocation6], 1920
    $region29: #{tpu_custom_call.1} parent=1 // pred_fallthru
      _
    // Predicated region
    $region30: #{tpu_custom_call.1} parent=1 // pred_check
      _
    $region31: #{tpu_custom_call.1} parent=1 // pred_check_branch
      %63 = sbr.rel (0) target = $region33
    $region32: #{tpu_custom_call.1} parent=1 // pred_region
      %65 = dma.done [#allocation6], 1920
    $region33: #{tpu_custom_call.1} parent=1 // pred_fallthru
      _
    %v66 = vld [vmem:[#allocation2] sm:$0x1]
    %v67 = vld [vmem:[#allocation5] sm:$0xff]
    %v68 = vld [vmem:[#allocation5 + $0x8] sm:$0xff]
    %v69 = vld [vmem:[#allocation5 + $0x10] sm:$0xff]
    %v70 = vld [vmem:[#allocation5 + $0x18] sm:$0xff]
    %v71 = vld [vmem:[#allocation5 + $0x20] sm:$0xff]
    %v72 = vld [vmem:[#allocation5 + $0x28] sm:$0xff]
    %v73 = vld [vmem:[#allocation5 + $0x30] sm:$0xff]
    %v74 = vld [vmem:[#allocation5 + $0x38] sm:$0xff]
    %v75 = vld [vmem:[#allocation5 + $0x40] sm:$0xff]
    %v76 = vld [vmem:[#allocation5 + $0x48] sm:$0xff]
    %v77 = vld [vmem:[#allocation5 + $0x50] sm:$0xff]
    %v78 = vld [vmem:[#allocation5 + $0x58] sm:$0xff]
    %v79 = vld [vmem:[#allocation5 + $0x60] sm:$0xff]
    %v80 = vld [vmem:[#allocation5 + $0x68] sm:$0xff]
    %v81 = vld [vmem:[#allocation5 + $0x70] sm:$0xff]
    %v82 = vld [vmem:[%s2] sm:$0x1]
    %vm83 = vcmask 982016
    %v85 = vsel %vm83, %v66, 0
    %87 = vmatpush.msra.mxu0 0.0
    %88 = vmatpush.msra.mxu0 %v81
    %89 = vmatpush.msra.mxu0 %v80
    %90 = vmatpush.msra.mxu0 %v79
    %91 = vmatpush.msra.mxu0 %v78
    %92 = vmatpush.msra.mxu0 %v77
    %93 = vmatpush.msra.mxu0 %v76
    %94 = vmatpush.msra.mxu0 %v75
    %95 = vmatpush.msra.mxu0 %v74
    %96 = vmatpush.msra.mxu0 %v73
    %97 = vmatpush.msra.mxu0 %v72
    %98 = vmatpush.msra.mxu0 %v71
    %99 = vmatpush.msra.mxu0 %v70
    %100 = vmatpush.msra.mxu0 %v69
    %101 = vmatpush.msra.mxu0 %v68
    %102 = vmatpush.msra.mxu0 %v67
    %103 = vmatmul.f32.gmra.mxu0 %v85
    %v104 = vpop.f32.mrf.mxu0
    %v105 = vadd.f32 %v82, %v104
    %106 = vdwg.mxu0
    %v107 = vmax.f32 %v105, 0.0
    %v108 = vld [vmem:[#allocation7] sm:$0xff]
    %v109 = vld [vmem:[#allocation7 + $0x8] sm:$0xff]
    %v110 = vld [vmem:[#allocation7 + $0x10] sm:$0xff]
    %v111 = vld [vmem:[#allocation7 + $0x18] sm:$0xff]
    %v112 = vld [vmem:[#allocation7 + $0x20] sm:$0xff]
    %v113 = vld [vmem:[#allocation7 + $0x28] sm:$0xff]
    %v114 = vld [vmem:[#allocation7 + $0x30] sm:$0xff]
    %v115 = vld [vmem:[#allocation7 + $0x38] sm:$0xff]
    %v116 = vld [vmem:[#allocation7 + $0x40] sm:$0xff]
    %v117 = vld [vmem:[#allocation7 + $0x48] sm:$0xff]
    %v118 = vld [vmem:[#allocation7 + $0x50] sm:$0xff]
    %v119 = vld [vmem:[#allocation7 + $0x58] sm:$0xff]
    %v120 = vld [vmem:[#allocation7 + $0x60] sm:$0xff]
    %v121 = vld [vmem:[#allocation7 + $0x68] sm:$0xff]
    %v122 = vld [vmem:[#allocation7 + $0x70] sm:$0xff]
    %v123 = vld [vmem:[%s4] sm:$0x1]
    %v125 = vsel %vm83, %v107, 0
    %127 = vmatpush.msra.mxu0 0.0
    %128 = vmatpush.msra.mxu0 %v122
    %129 = vmatpush.msra.mxu0 %v121
    %130 = vmatpush.msra.mxu0 %v120
    %131 = vmatpush.msra.mxu0 %v119
    %132 = vmatpush.msra.mxu0 %v118
    %133 = vmatpush.msra.mxu0 %v117
    %134 = vmatpush.msra.mxu0 %v116
    %135 = vmatpush.msra.mxu0 %v115
    %136 = vmatpush.msra.mxu0 %v114
    %137 = vmatpush.msra.mxu0 %v113
    %138 = vmatpush.msra.mxu0 %v112
    %139 = vmatpush.msra.mxu0 %v111
    %140 = vmatpush.msra.mxu0 %v110
    %141 = vmatpush.msra.mxu0 %v109
    %142 = vmatpush.msra.mxu0 %v108
    %143 = vmatmul.f32.gmra.mxu0 %v125
    %v144 = vpop.f32.mrf.mxu0
    %v145 = vadd.f32 %v123, %v144
    %146 = vdwg.mxu0
    %vm147 = vcmask 974848
    %148 = vst.msk [vmem:[#allocation8] sm:$0x1] %vm147, %v145
    // Predicated region
    $region34: #{tpu_custom_call.1} parent=1 // pred_check
      _
    $region35: #{tpu_custom_call.1} parent=1 // pred_check_branch
      %150 = sbr.rel (0) target = $region37
    $region36: #{tpu_custom_call.1} parent=1 // pred_region
      %152 = vsyncadd [#allocation4], 0
      %s154 = sshll.u32 [#allocation8], 4
      %s155 = int_to_ptr.vmem [resolvable:$true] %s154
      %s156 = sshll.u32 %s5, 4
      %s157 = int_to_ptr.hbm [resolvable:$true] %s156
      %159 = dma.vmem_to_hbm [thread:$0]  %s155, 16, %s157, [#allocation4]
    $region37: #{tpu_custom_call.1} parent=1 // pred_fallthru
      _
    // Predicated region
    $region38: #{tpu_custom_call.1} parent=1 // pred_check
      _
    $region39: #{tpu_custom_call.1} parent=1 // pred_check_branch
      %161 = sbr.rel (0) target = $region41
    $region40: #{tpu_custom_call.1} parent=1 // pred_region
      %163 = dma.done [#allocation4], 16
    $region41: #{tpu_custom_call.1} parent=1 // pred_fallthru
      _
    %164 = vsyncpa [#allocation3], 1
    %165 = vsyncpa [#allocation6], 1
    %166 = vsyncpa [#allocation4], 1

</llo_original>
